<compile_context>
chip_gen: v7x
topology: tpu7x:2x2x1
jax: 0.10.0
libtpu: 0.0.40
codegen_flags: <defaults>
</compile_context>

<pallas_src>
import math

import jax
import jax.numpy as jnp
from jax.experimental import pallas as pl
from jax.experimental.pallas import tpu as pltpu

_HIGHEST = jax.lax.Precision.HIGHEST


# ----------------------------------------------------------------- scores ----
# Shared score-tile math.  Inputs keep their original HBM layouts (no wrapper-side
# transposes of the big tensors):
#   hid: (TB, H)      from hidden (1, B, H) with the unit dim squeezed
#   enc: (TL, TB, H)  from encoder_outputs (L, B, H)
#   returns (TB, TL) f32 raw scores (lane-dense over L).

def _scores_dot(hid, enc):
    h = hid.astype(jnp.float32)[None, :, :]                          # (1, TB, H)
    s_lb = jnp.sum(enc.astype(jnp.float32) * h, axis=-1)             # (TL, TB)
    return s_lb.T                                                    # (TB, TL)


def _scores_general(hid, enc, w):
    # score[l,b] = sum_h enc[l,b,h] * (hid @ W)[b,h]   (the nn.Linear bias term is
    # constant over l and cancels exactly under the softmax -> dropped).
    t = jnp.dot(hid, w, precision=_HIGHEST,
                preferred_element_type=jnp.float32)                  # (TB, H)
    s_lb = jnp.sum(enc.astype(jnp.float32) * t[None, :, :], axis=-1)  # (TL, TB)
    return s_lb.T


def _scores_concat(hid, enc, wt_h, wt_e, bias, v):
    # energy = tanh(hid @ Wh^T + enc @ We^T + b);  score = sum_h v[h] * energy.
    tl, tb, h = enc.shape
    th = jnp.dot(hid, wt_h, precision=_HIGHEST,
                 preferred_element_type=jnp.float32) + bias          # (TB, H)
    # Row-major collapse (TL, TB, H) -> (TL*TB, H): one big MXU matmul instead of
    # TB degenerate (L, H) matmuls with strided mid-axis slices.
    te = jnp.dot(enc.reshape(tl * tb, h), wt_e, precision=_HIGHEST,
                 preferred_element_type=jnp.float32)                 # (TL*TB, H)
    # TODO(synk): on v6e/v7x run tanh in bf16 (bf16 EUP rate) once accuracy allows.
    energy = jnp.tanh(te.reshape(tl, tb, h) + th[None, :, :])        # (TL, TB, H)
    s_lb = jnp.sum(v.astype(jnp.float32) * energy, axis=-1)          # (TL, TB)
    return s_lb.T


def _softmax_lanes(s):
    """Exact softmax over the lane (last) axis, f32 accumulation."""
    s = s.astype(jnp.float32)
    m = jnp.max(s, axis=-1, keepdims=True)
    e = jnp.exp(s - m)
    return e / jnp.sum(e, axis=-1, keepdims=True)


# ---------------------------------------------------------------- kernels ----

def _make_kernels(score_fn):
    def fused_kernel(hid_ref, enc_ref, *rest):        # scores + softmax, one pass
        *w_refs, out_ref = rest
        s = score_fn(hid_ref[...], enc_ref[...], *(r[...] for r in w_refs))
        out_ref[...] = _softmax_lanes(s).astype(out_ref.dtype)

    def scores_kernel(hid_ref, enc_ref, *rest):       # L-tiled raw-score pass
        *w_refs, out_ref = rest
        out_ref[...] = score_fn(
            hid_ref[...], enc_ref[...], *(r[...] for r in w_refs)
        ).astype(out_ref.dtype)

    return fused_kernel, scores_kernel


def _softmax_kernel(s_ref, out_ref):
    out_ref[...] = _softmax_lanes(s_ref[...]).astype(out_ref.dtype)


# --------------------------------------------------------------- planning ----

def _plan_tiles(L, Bp, H, itemsize, budget_bytes, max_tb):
    """Pick (TB, TL): TB a multiple of 8 dividing Bp, TL == L (fused path) or a
    multiple of 128 dividing L, such that the encoder block TL*TB*H*itemsize
    stays under budget_bytes (bounded VMEM -> v7x-safe, pipelineable)."""
    max_tb = max(8, max_tb)
    cands = [tb for tb in range(8, min(Bp, max_tb) + 1, 8) if Bp % tb == 0]
    multi = sorted([tb for tb in cands if Bp // tb >= 2], reverse=True)
    single = sorted([tb for tb in cands if Bp // tb < 2], reverse=True)
    order = multi + single          # prefer >=2 batch tiles (feeds both v7x TCs)
    # 1) fused: full-L enc block fits the budget.
    for tb in order:
        if L * tb * H * itemsize <= budget_bytes:
            return tb, L
    # 2) tiled: TL a multiple of 128 (lane-dense, layout-legal (TB, TL) score blocks).
    for tb in order:
        max_tl = budget_bytes // (tb * H * itemsize)
        tls = [tl for tl in range(128, min(L, max_tl) + 1, 128) if L % tl == 0]
        if tls:
            return tb, max(tls)
    # 3) fallback: single full-L block with the smallest batch tile.
    # TODO(synk): mask partial L tiles so odd L / tiny budgets don't fall back to
    # an unbounded full-L encoder block.
    return min(cands), L


def _cost_estimate(method, L, B, H, itemsize):
    in_bytes = (B * H + L * B * H) * itemsize
    out_bytes = B * L * 4
    if method == "dot":
        flops, trans, w_bytes = 2 * L * B * H, B * L, 0
    elif method == "general":
        flops, trans, w_bytes = 2 * L * B * H + 2 * B * H * H, B * L, H * H * itemsize
    else:  # concat
        flops = 2 * L * B * H * H + 2 * B * H * H + 2 * L * B * H
        trans = L * B * H + B * L
        w_bytes = (2 * H * H + 2 * H) * itemsize
    return pl.CostEstimate(flops=flops, transcendentals=trans,
                           bytes_accessed=in_bytes + out_bytes + w_bytes)


def _vmem_limit(*block_bytes):
    # Double-buffered blocks + slack; the floor gives the compiler headroom over
    # the 16/32 MiB default scoped limits while the default 8 MiB enc-block
    # budget keeps the total well under v7x's 64 MiB physical VMEM.
    return int(max(2 * sum(block_bytes) + (4 << 20), 32 << 20))


# ---------------------------------------------------------------- wrapper ----

def attn_forward(method, hidden, encoder_outputs, params=None, *,
                 compute_dtype=None, enc_block_budget_bytes=8 << 20,
                 max_batch_tile=64):
    """Attn forward: hidden (1, B, H), encoder_outputs (L, B, H) -> (B, 1, L) f32.

    compute_dtype: pass jnp.bfloat16 in production to halve the dominant encoder
    HBM read (MXU matmuls run bf16, accumulation stays f32)."""
    if method not in ("dot", "general", "concat"):
        raise ValueError(method, "is not an appropriate attention method.")
    params = params or {}
    L, B, H = encoder_outputs.shape

    if compute_dtype is not None:
        hidden = hidden.astype(compute_dtype)
        encoder_outputs = encoder_outputs.astype(compute_dtype)
    itemsize = jnp.dtype(encoder_outputs.dtype).itemsize

    # Pad the batch to a multiple of 8: every block keeps an 8-aligned second-minor
    # dim; padded rows stay finite and are sliced off at the end.
    Bp = -(-B // 8) * 8
    if Bp != B:
        hidden = jnp.pad(hidden, ((0, 0), (0, Bp - B), (0, 0)))
        encoder_outputs = jnp.pad(encoder_outputs, ((0, 0), (0, Bp - B), (0, 0)))

    TB, TL = _plan_tiles(L, Bp, H, itemsize, enc_block_budget_bytes, max_batch_tile)
    nb, nl = Bp // TB, L // TL

    # Weights: small, pre-arranged once in the wrapper, replicated across the grid.
    if method == "dot":
        score_fn, weights = _scores_dot, []
    elif method == "general":
        w = params["attn_w"]                        # (H, H); kernel computes hid @ W
        if compute_dtype is not None:
            w = w.astype(compute_dtype)
        score_fn, weights = _scores_general, [w]
    else:
        W = params["attn_w"]                        # (H, 2H): [hidden | encoder] halves
        wt_h, wt_e = W[:, :H].T, W[:, H:].T         # (H, H) each
        if compute_dtype is not None:
            wt_h, wt_e = wt_h.astype(compute_dtype), wt_e.astype(compute_dtype)
        bias = params["attn_b"].reshape(1, H).astype(jnp.float32)
        v = params["v"].reshape(1, H).astype(jnp.float32)
        score_fn, weights = _scores_concat, [wt_h, wt_e, bias, v]

    fused_kernel, scores_kernel = _make_kernels(score_fn)
    weight_specs = [pl.BlockSpec(w.shape, lambda *_: (0, 0)) for w in weights]
    w_bytes = sum(int(w.size) * jnp.dtype(w.dtype).itemsize for w in weights)
    cost = _cost_estimate(method, L, Bp, H, itemsize)

    enc_blk = TL * TB * H * itemsize
    hid_blk = TB * H * itemsize

    if nl == 1:
        # Fused path: scores + exact softmax in one kernel, lane-dense (TB, L) output.
        cp = pltpu.CompilerParams(
            dimension_semantics=("parallel",),
            vmem_limit_bytes=_vmem_limit(enc_blk, hid_blk, TB * L * 4, w_bytes))
        out = pl.pallas_call(
            fused_kernel,
            out_shape=jax.ShapeDtypeStruct((Bp, L), jnp.float32),
            grid=(nb,),
            in_specs=[pl.BlockSpec((None, TB, H), lambda i: (0, i, 0)),
                      pl.BlockSpec((L, TB, H), lambda i: (0, i, 0))] + weight_specs,
            out_specs=pl.BlockSpec((TB, L), lambda i: (i, 0)),
            compiler_params=cp,
            cost_estimate=cost,
        )(hidden, encoder_outputs, *weights)
    else:
        # Pass 1: raw scores, grid (batch_tiles, L_tiles) -- both parallel -- with the
        # encoder block bounded at TL*TB*H*itemsize <= budget.
        # TODO(synk): sweep pipeline_mode=pl.Buffered(3) on the enc spec for the
        # mem-bound dot/general paths.
        cp = pltpu.CompilerParams(
            dimension_semantics=("parallel", "parallel"),
            vmem_limit_bytes=_vmem_limit(enc_blk, hid_blk, TB * TL * 4, w_bytes))
        scores = pl.pallas_call(
            scores_kernel,
            out_shape=jax.ShapeDtypeStruct((Bp, L), jnp.float32),
            grid=(nb, nl),
            in_specs=[pl.BlockSpec((None, TB, H), lambda i, l: (0, i, 0)),
                      pl.BlockSpec((TL, TB, H), lambda i, l: (l, i, 0))] + weight_specs,
            out_specs=pl.BlockSpec((TB, TL), lambda i, l: (i, l)),
            compiler_params=cp,
            cost_estimate=cost,
        )(hidden, encoder_outputs, *weights)
        # Pass 2: exact softmax over the full L axis (tiny: ~B*L*8 bytes of HBM).
        tbs = 8
        out = pl.pallas_call(
            _softmax_kernel,
            out_shape=jax.ShapeDtypeStruct((Bp, L), jnp.float32),
            grid=(Bp // tbs,),
            in_specs=[pl.BlockSpec((tbs, L), lambda i: (i, 0))],
            out_specs=pl.BlockSpec((tbs, L), lambda i: (i, 0)),
            compiler_params=pltpu.CompilerParams(
                dimension_semantics=("parallel",),
                vmem_limit_bytes=_vmem_limit(tbs * L * 4, tbs * L * 4)),
        )(scores)

    if Bp != B:
        out = out[:B]
    return out.reshape(B, 1, L)   # free: just adds the unit middle dim


# ------------------------------------------------------------- reference ----

def attn_reference(method, hidden, enc_out, params):
    """Pure-JAX reference, faithful to the PyTorch module (f32, exact matmuls)."""
    if method == "dot":
        e = jnp.sum(hidden * enc_out, axis=2)
    elif method == "general":
        energy = jnp.einsum("lbh,kh->lbk", enc_out, params["attn_w"],
                            precision=_HIGHEST) + params["attn_b"]
        e = jnp.sum(hidden * energy, axis=2)
    else:  # concat
        Lr = enc_out.shape[0]
        hid_exp = jnp.broadcast_to(hidden, (Lr,) + hidden.shape[1:])
        cat = jnp.concatenate([hid_exp, enc_out], axis=2)
        energy = jnp.tanh(jnp.einsum("lbc,kc->lbk", cat, params["attn_w"],
                                     precision=_HIGHEST) + params["attn_b"])
        e = jnp.sum(params["v"] * energy, axis=2)
    return jax.nn.softmax(e.T, axis=1)[:, None, :]          # (B, 1, L)


# ------------------------------------------------------------------ main ----

if __name__ == "__main__":
    key = jax.random.PRNGKey(0)
    configs = [
        dict(B=2, L=8, H=32, budget=8 << 20),       # fused single-block path
        dict(B=16, L=1024, H=128, budget=1 << 20),  # L-tiled two-pass path, grid (2, 4)
    ]
    # dot has no MXU matmul -> tight tolerance; general/concat allow for TPU
    # matmul-pass rounding differences between kernel and reference.
    tol = {"dot": 1e-4, "general": 2e-2, "concat": 2e-2}

    ok = True
    for cfg in configs:
        B, L, H = cfg["B"], cfg["L"], cfg["H"]
        k = jax.random.fold_in(key, 131 * B + L)
        k_hid, k_enc, k_wg, k_bg, k_wc, k_bc, k_v = jax.random.split(k, 7)
        hidden = jax.random.normal(k_hid, (1, B, H), jnp.float32)
        enc = jax.random.normal(k_enc, (L, B, H), jnp.float32)

        bound_g = 1.0 / math.sqrt(H)
        bound_c = 1.0 / math.sqrt(2 * H)
        params = {
            "dot": {},
            "general": {
                "attn_w": jax.random.uniform(k_wg, (H, H), jnp.float32, -bound_g, bound_g),
                "attn_b": jax.random.uniform(k_bg, (H,), jnp.float32, -bound_g, bound_g),
            },
            "concat": {
                "attn_w": jax.random.uniform(k_wc, (H, 2 * H), jnp.float32, -bound_c, bound_c),
                "attn_b": jax.random.uniform(k_bc, (H,), jnp.float32, -bound_c, bound_c),
                "v": jax.random.normal(k_v, (H,), jnp.float32),
            },
        }

        for method in ("dot", "general", "concat"):
            out = jax.block_until_ready(
                attn_forward(method, hidden, enc, params[method],
                             enc_block_budget_bytes=cfg["budget"]))
            ref = jax.block_until_ready(attn_reference(method, hidden, enc, params[method]))
            good_shape = out.shape == (B, 1, L)
            close = bool(jnp.allclose(out, ref, atol=tol[method], rtol=tol[method]))
            if not (good_shape and close):
                ok = False
                print(f"MISMATCH method={method} B={B} L={L} H={H} shape={out.shape} "
                      f"max_err={float(jnp.max(jnp.abs(out - ref)))}")

    if ok:
        print("KERNEL_OK")
    else:
        raise SystemExit("mismatch vs reference")
</pallas_src>

<mosaic_0001>
module attributes {stable_mosaic.version = 11 : i64} {
  func.func @fused_kernel(%arg0: i32, %arg1: memref<1x8x32xf32, #tpu.memory_space<vmem>>, %arg2: memref<8x8x32xf32, #tpu.memory_space<vmem>>, %arg3: memref<8x8xf32, #tpu.memory_space<vmem>>) attributes {dimension_semantics = [#tpu.dimension_semantics<parallel>], iteration_bounds = array<i64: 1>, scalar_prefetch = 0 : i64, scratch_operands = 0 : i64, tpu.core_type = #tpu.core_type<tc>, window_params = [{transform_indices = @transform_0, window_bounds = array<i64: 1, 8, 32>}, {transform_indices = @transform_1, window_bounds = array<i64: 8, 8, 32>}, {transform_indices = @transform_2, window_bounds = array<i64: 8, 8>}]} {
    %c0 = arith.constant 0 : index
    %c0_0 = arith.constant 0 : index
    %c0_1 = arith.constant 0 : index
    %0 = vector.load %arg1[%c0, %c0_0, %c0_1] : memref<1x8x32xf32, #tpu.memory_space<vmem>>, vector<1x8x32xf32>
    %1 = vector.shape_cast %0 : vector<1x8x32xf32> to vector<8x32xf32>
    %c0_2 = arith.constant 0 : index
    %c0_3 = arith.constant 0 : index
    %c0_4 = arith.constant 0 : index
    %2 = vector.load %arg2[%c0_2, %c0_3, %c0_4] : memref<8x8x32xf32, #tpu.memory_space<vmem>>, vector<8x8x32xf32>
    %3 = vector.shape_cast %1 : vector<8x32xf32> to vector<1x8x32xf32>
    %4 = vector.broadcast %3 : vector<1x8x32xf32> to vector<8x8x32xf32>
    %5 = arith.mulf %2, %4 : vector<8x8x32xf32>
    %cst = arith.constant dense<0.000000e+00> : vector<8x8xf32>
    %6 = vector.multi_reduction <add>, %5, %cst [2] : vector<8x8x32xf32> to vector<8x8xf32>
    %7 = tpu.transpose %6, [1, 0] : vector<8x8xf32> -> vector<8x8xf32>
    %cst_5 = arith.constant dense<0xFF800000> : vector<8xf32>
    %8 = vector.multi_reduction <maximumf>, %7, %cst_5 [1] : vector<8x8xf32> to vector<8xf32>
    %9 = vector.shape_cast %8 : vector<8xf32> to vector<8x1xf32>
    %10 = vector.broadcast %9 : vector<8x1xf32> to vector<8x8xf32>
    %11 = arith.subf %7, %10 : vector<8x8xf32>
    %12 = math.exp %11 : vector<8x8xf32>
    %cst_6 = arith.constant dense<0.000000e+00> : vector<8xf32>
    %13 = vector.multi_reduction <add>, %12, %cst_6 [1] : vector<8x8xf32> to vector<8xf32>
    %14 = vector.shape_cast %13 : vector<8xf32> to vector<8x1xf32>
    %15 = vector.broadcast %14 : vector<8x1xf32> to vector<8x8xf32>
    %16 = arith.divf %12, %15 : vector<8x8xf32>
    %c0_7 = arith.constant 0 : index
    %c0_8 = arith.constant 0 : index
    %17 = vector.load %arg3[%c0_7, %c0_8] : memref<8x8xf32, #tpu.memory_space<vmem>>, vector<8x8xf32>
    tpu.vector_store %arg3[%c0_7, %c0_8], %16 {strides = array<i32>} : memref<8x8xf32, #tpu.memory_space<vmem>>, vector<8x8xf32>,
    return
  }
  func.func @transform_0(%arg0: i32) -> (i32, i32, i32) {
    %c0_i32 = arith.constant 0 : i32
    %c0_i32_0 = arith.constant 0 : i32
    %c0_i32_1 = arith.constant 0 : i32
    return %c0_i32, %arg0, %c0_i32_0 : i32, i32, i32
  }
  func.func @transform_1(%arg0: i32) -> (i32, i32, i32) {
    %c0_i32 = arith.constant 0 : i32
    %c0_i32_0 = arith.constant 0 : i32
    %c0_i32_1 = arith.constant 0 : i32
    return %c0_i32, %arg0, %c0_i32_0 : i32, i32, i32
  }
  func.func @transform_2(%arg0: i32) -> (i32, i32) {
    %c0_i32 = arith.constant 0 : i32
    %c0_i32_0 = arith.constant 0 : i32
    return %arg0, %c0_i32 : i32, i32
  }
}

</mosaic_0001>

<llo_original>
// kernel: tpu_custom_call.1
$region0: #{tpu_custom_call.1}
  #allocation0 [shape = 'u32[]', space=smem, size = 0x4, offset = 0x4, fixed_abs, tag = 'smem constant byte address 0x4 - core index']
  #allocation1 [shape = 'u32[144,128]{1,0:T(1,128)}', space=vmem, size = 0x12000, scoped, tag = 'internal scratch']
  %s0 = inlined_call_operand.hbm [shape: f32[1,8,32], index: 0, kind: input, shape index: {}]
  %s1 = inlined_call_operand.hbm [shape: f32[8,8,32], index: 1, kind: input, shape index: {}]
  %s2 = inlined_call_operand.hbm [shape: f32[8,8], index: 2, kind: output, shape index: {}]
  %s3 = sld [smem:[#allocation0]]
  $region26: #{tpu_custom_call.1} parent=0
    _
  %s5 = ssub.s32 1, %s3
  %s6 = scalar_select 0, %s5, %s3
  $region1: #{tpu_custom_call.1} parent=0
    #allocation2 [shape = 'u8[4096]{0}', space=vmem, size = 0x1000, scoped, tag = 'input window, operand 0, single buffered']
    #allocation3 [shape = 's32[1]{0}', space=sflag, size = 0x4, scoped, tag = 'scoped memory for tpu_custom_call.1']
    #allocation4 [shape = 's32[1]{0}', space=sflag, size = 0x4, scoped, tag = 'scoped memory for tpu_custom_call.1']
    #allocation5 [shape = 'u8[32768]{0}', space=vmem, size = 0x8000, scoped, tag = 'input window, operand 1, single buffered']
    #allocation6 [shape = 's32[1]{0}', space=sflag, size = 0x4, scoped, tag = 'scoped memory for tpu_custom_call.1']
    #allocation7 [shape = 'u8[4096]{0}', space=vmem, size = 0x1000, scoped, tag = 'output window, operand 0, single buffered']
    %7 = vsyncpa [#allocation3], 0
    %8 = vsyncpa [#allocation6], 0
    %9 = vsyncpa [#allocation4], 0
    // Predicated region
    $region2: #{tpu_custom_call.1} parent=1 // pred_check
      _
    $region3: #{tpu_custom_call.1} parent=1 // pred_check_branch
      %11 = sbr.rel (0) target = $region5
    $region4: #{tpu_custom_call.1} parent=1 // pred_region
      %s13 = ssub.s32 128, 128
      %14 = vsyncadd [#allocation3], %s13
      %s16 = sshll.u32 [#allocation2], 4
      %s17 = int_to_ptr.vmem [resolvable:$true] %s16
      %19 = dma.hbm_to_vmem [thread:$0]  %s0, 128, %s17, [#allocation3]
    $region5: #{tpu_custom_call.1} parent=1 // pred_fallthru
      _
    // Predicated region
    $region6: #{tpu_custom_call.1} parent=1 // pred_check
      _
    $region7: #{tpu_custom_call.1} parent=1 // pred_check_branch
      %21 = sbr.rel (0) target = $region9
    $region8: #{tpu_custom_call.1} parent=1 // pred_region
      %s23 = ssub.s32 1024, 1024
      %24 = vsyncadd [#allocation6], %s23
      %s25 = sshll.u32 [#allocation5], 4
      %s26 = int_to_ptr.vmem [resolvable:$true] %s25
      %31 = dma.hbm_to_vmem [thread:$0]  %s1, 1024, %s26, [#allocation6], 128, 128, 8
    $region9: #{tpu_custom_call.1} parent=1 // pred_fallthru
      _
    // Predicated region
    $region10: #{tpu_custom_call.1} parent=1 // pred_check
      _
    $region11: #{tpu_custom_call.1} parent=1 // pred_check_branch
      %33 = sbr.rel (0) target = $region13
    $region12: #{tpu_custom_call.1} parent=1 // pred_region
      %34 = dma.done [#allocation3], 128
    $region13: #{tpu_custom_call.1} parent=1 // pred_fallthru
      _
    // Predicated region
    $region14: #{tpu_custom_call.1} parent=1 // pred_check
      _
    $region15: #{tpu_custom_call.1} parent=1 // pred_check_branch
      %36 = sbr.rel (0) target = $region17
    $region16: #{tpu_custom_call.1} parent=1 // pred_region
      %37 = dma.done [#allocation6], 1024
    $region17: #{tpu_custom_call.1} parent=1 // pred_fallthru
      _
    %v38 = vld [vmem:[#allocation2] sm:$0xff]
    %v39 = vld [vmem:[#allocation5] sm:$0xff]
    %v40 = vld [vmem:[#allocation5 + $0x8] sm:$0xff]
    %v41 = vld [vmem:[#allocation5 + $0x10] sm:$0xff]
    %v42 = vld [vmem:[#allocation5 + $0x18] sm:$0xff]
    %v43 = vld [vmem:[#allocation5 + $0x20] sm:$0xff]
    %v44 = vld [vmem:[#allocation5 + $0x28] sm:$0xff]
    %v45 = vld [vmem:[#allocation5 + $0x30] sm:$0xff]
    %v46 = vld [vmem:[#allocation5 + $0x38] sm:$0xff]
    %v47 = vmul.f32 %v39, %v38
    %v48 = vmul.f32 %v40, %v38
    %v49 = vmul.f32 %v41, %v38
    %v50 = vmul.f32 %v42, %v38
    %v51 = vmul.f32 %v43, %v38
    %v52 = vmul.f32 %v44, %v38
    %v53 = vmul.f32 %v45, %v38
    %v54 = vmul.f32 %v46, %v38
    %vm55 = vcmask 261120
    %v56 = vsel %vm55, %v47, 0.0
    %57 = vadd.xlane.f32.xlu0 %v56
    %v58 = vpop.xlane.xlu0 %57
    %v59 = vsel %vm55, %v48, 0.0
    %60 = vadd.xlane.f32.xlu0 %v59
    %v61 = vpop.xlane.xlu0 %60
    %v62 = vsel %vm55, %v49, 0.0
    %63 = vadd.xlane.f32.xlu0 %v62
    %v64 = vpop.xlane.xlu0 %63
    %v65 = vsel %vm55, %v50, 0.0
    %66 = vadd.xlane.f32.xlu0 %v65
    %v67 = vpop.xlane.xlu0 %66
    %v68 = vsel %vm55, %v51, 0.0
    %69 = vadd.xlane.f32.xlu0 %v68
    %v70 = vpop.xlane.xlu0 %69
    %v71 = vsel %vm55, %v52, 0.0
    %72 = vadd.xlane.f32.xlu0 %v71
    %v73 = vpop.xlane.xlu0 %72
    %v74 = vsel %vm55, %v53, 0.0
    %75 = vadd.xlane.f32.xlu0 %v74
    %v76 = vpop.xlane.xlu0 %75
    %v77 = vsel %vm55, %v54, 0.0
    %78 = vadd.xlane.f32.xlu0 %v77
    %v79 = vpop.xlane.xlu0 %78
    %v88 = vlaneseq
    %v89 = vand.u32 %v88, 127
    %v90 = vlaneseq
    %v91 = vshrl.u32 %v90, 7
    %v92 = vsub.s32 %v89, %v91
    %v93 = vrot.slane %v58, %v92
    %v94 = vlaneseq
    %v95 = vshrl.u32 %v94, 7
    %v96 = vsub.s32 %v89, %v95
    %v97 = vrot.slane %v61, %v96
    %v98 = vlaneseq
    %v99 = vshrl.u32 %v98, 7
    %v100 = vsub.s32 %v89, %v99
    %v101 = vrot.slane %v64, %v100
    %v102 = vlaneseq
    %v103 = vshrl.u32 %v102, 7
    %v104 = vsub.s32 %v89, %v103
    %v105 = vrot.slane %v67, %v104
    %v106 = vlaneseq
    %v107 = vshrl.u32 %v106, 7
    %v108 = vsub.s32 %v89, %v107
    %v109 = vrot.slane %v70, %v108
    %v110 = vlaneseq
    %v111 = vshrl.u32 %v110, 7
    %v112 = vsub.s32 %v89, %v111
    %v113 = vrot.slane %v73, %v112
    %v114 = vlaneseq
    %v115 = vshrl.u32 %v114, 7
    %v116 = vsub.s32 %v89, %v115
    %v117 = vrot.slane %v76, %v116
    %v118 = vlaneseq
    %v119 = vshrl.u32 %v118, 7
    %v120 = vsub.s32 %v89, %v119
    %v121 = vrot.slane %v79, %v120
    %vm122 = vcmask 1041409
    %v123 = vsel %vm122, %v97, %v93
    %vm124 = vcmask 1042434
    %v125 = vsel %vm124, %v101, %v123
    %vm126 = vcmask 1043459
    %v127 = vsel %vm126, %v105, %v125
    %vm128 = vcmask 1044484
    %v129 = vsel %vm128, %v109, %v127
    %vm130 = vcmask 1045509
    %v131 = vsel %vm130, %v113, %v129
    %vm132 = vcmask 1046534
    %v133 = vsel %vm132, %v117, %v131
    %vm134 = vcmask 1047559
    %v135 = vsel %vm134, %v121, %v133
    %137 = vxpose.xlu0.b32.start [1/16] %v135, 128
    %138 = vxpose.xlu0.b32.cont [2/16] 0.0, 128
    %139 = vxpose.xlu0.b32.cont [3/16] 0.0, 128
    %140 = vxpose.xlu0.b32.cont [4/16] 0.0, 128
    %141 = vxpose.xlu0.b32.cont [5/16] 0.0, 128
    %142 = vxpose.xlu0.b32.cont [6/16] 0.0, 128
    %143 = vxpose.xlu0.b32.cont [7/16] 0.0, 128
    %144 = vxpose.xlu0.b32.cont [8/16] 0.0, 128
    %145 = vxpose.xlu0.b32.cont [9/16] 0.0, 128
    %146 = vxpose.xlu0.b32.cont [10/16] 0.0, 128
    %147 = vxpose.xlu0.b32.cont [11/16] 0.0, 128
    %148 = vxpose.xlu0.b32.cont [12/16] 0.0, 128
    %149 = vxpose.xlu0.b32.cont [13/16] 0.0, 128
    %150 = vxpose.xlu0.b32.cont [14/16] 0.0, 128
    %151 = vxpose.xlu0.b32.cont [15/16] 0.0, 128
    %152 = vxpose.xlu0.b32.end [16/16] 0.0, 128
    %v153 = vpop.trf.xlu0
    %v154 = vpop.trf.xlu0
    %v155 = vpop.trf.xlu0
    %v156 = vpop.trf.xlu0
    %v157 = vpop.trf.xlu0
    %v158 = vpop.trf.xlu0
    %v159 = vpop.trf.xlu0
    %v160 = vpop.trf.xlu0
    %v161 = vpop.trf.xlu0
    %v162 = vpop.trf.xlu0
    %v163 = vpop.trf.xlu0
    %v164 = vpop.trf.xlu0
    %v165 = vpop.trf.xlu0
    %v166 = vpop.trf.xlu0
    %v167 = vpop.trf.xlu0
    %v168 = vpop.trf.xlu0
    %vm169 = vcmask 64512
    %v170 = vsel %vm169, %v153, -inf
    %171 = vmax.xlane.f32.xlu0 %v170
    %v172 = vpop.xlane.xlu0 %171
    %v173 = vsub.f32 %v153, %v172
    %v174 = vmul.f32 %v173, 1.442695
    %v175 = vpow.pop %v174
    %v176 = vsel %vm169, %v175, 0.0
    %177 = vadd.xlane.f32.xlu0 %v176
    %v178 = vpop.xlane.xlu0 %177
    %v179 = vrcp.pop %v178
    %v180 = vmul.f32 %v175, %v179
    %181 = vst.msk [vmem:[#allocation7] sm:$0xff] %vm169, %v180
    // Predicated region
    $region18: #{tpu_custom_call.1} parent=1 // pred_check
      _
    $region19: #{tpu_custom_call.1} parent=1 // pred_check_branch
      %183 = sbr.rel (0) target = $region21
    $region20: #{tpu_custom_call.1} parent=1 // pred_region
      %s185 = ssub.s32 128, 128
      %186 = vsyncadd [#allocation4], %s185
      %s188 = sshll.u32 [#allocation7], 4
      %s189 = int_to_ptr.vmem [resolvable:$true] %s188
      %191 = dma.vmem_to_hbm [thread:$0]  %s189, 128, %s2, [#allocation4]
    $region21: #{tpu_custom_call.1} parent=1 // pred_fallthru
      _
    // Predicated region
    $region22: #{tpu_custom_call.1} parent=1 // pred_check
      _
    $region23: #{tpu_custom_call.1} parent=1 // pred_check_branch
      %193 = sbr.rel (0) target = $region25
    $region24: #{tpu_custom_call.1} parent=1 // pred_region
      %194 = dma.done [#allocation4], 128
    $region25: #{tpu_custom_call.1} parent=1 // pred_fallthru
      _
    %195 = vsyncpa [#allocation3], 1
    %196 = vsyncpa [#allocation6], 1
    %197 = vsyncpa [#allocation4], 1

</llo_original>
